<compile_context>
chip_gen: v5e
topology: v5e:2x2
jax: 0.10.0
libtpu: 0.0.40
codegen_flags: <defaults>
</compile_context>

<pallas_src>
import functools
import math

import jax
import jax.numpy as jnp
from jax.experimental import pallas as pl
from jax.experimental.pallas import tpu as pltpu


DMA_RING = 8  # row-gather DMAs kept in flight per tile (power of two)


def _emb_gather_kernel(ids_ref, emb_hbm, out_ref, sem, *,
                       scale, tile_t, vocab, ring):
    """Gather one (tile_t, d_model_pad) tile of embedding rows and scale it.

    ids_ref : (T,) int32 token ids in SMEM (scalar prefetch).
    emb_hbm : (vocab, d_model_pad) embedding table, left in HBM (pl.ANY).
    out_ref : (tile_t, d_model_pad) VMEM output block; row DMAs land here.
    sem     : ring of `ring` DMA-completion semaphores.
    """
    tile = pl.program_id(0)
    base = tile * tile_t
    n_ids = ids_ref.shape[0]

    def copy_for(t):
        # Clamp the token index (padded tail of the last tile) and the id
        # itself (OOB ids; PyTorch would raise) so the DMA stays in bounds.
        tok = jnp.minimum(base + t, n_ids - 1)
        row = jnp.clip(ids_ref[tok], 0, vocab - 1)
        return pltpu.make_async_copy(
            emb_hbm.at[pl.ds(row, 1)],          # (1, d_model_pad) HBM source
            out_ref.at[pl.ds(t, 1)],            # (1, d_model_pad) VMEM dest
            sem.at[t & (ring - 1)],
        )

    # Prime the DMA ring (static unroll, at most `ring` copies).
    n_prime = min(ring, tile_t)
    for t in range(n_prime):
        copy_for(t).start()

    # Steady state: retire copy i, immediately reuse its slot for copy i+ring.
    if tile_t > ring:
        @pl.loop(0, tile_t - ring)
        def _(i):
            copy_for(i).wait()
            copy_for(i + ring).start()

    # Drain the remaining in-flight copies.
    @pl.loop(tile_t - n_prime, tile_t)
    def _(i):
        copy_for(i).wait()

    # Single full-tile scale: lane/sublane-dense VPU work + one unmasked store.
    out_ref[...] = (out_ref[...].astype(jnp.float32) * scale).astype(out_ref.dtype)


def embedding_forward(x, emb_table, *, tile_t=512, dma_ring=DMA_RING):
    """out[b, s, :] = emb_table[x[b, s], :] / sqrt(d_model); x: (B, S) int ids."""
    assert dma_ring & (dma_ring - 1) == 0, "dma_ring must be a power of two"
    B, S = x.shape
    vocab, d_model = emb_table.shape
    T = B * S
    scale = 1.0 / math.sqrt(d_model)
    itemsize = jnp.dtype(emb_table.dtype).itemsize

    # Lane-dense rows: pad d_model up to a multiple of 128 so every row DMA and
    # the output store are unmasked. (Production d_model is usually already a
    # multiple of 128, making this a no-op.)
    d_pad = pl.cdiv(d_model, 128) * 128
    table = emb_table if d_pad == d_model else jnp.pad(
        emb_table, ((0, 0), (0, d_pad - d_model)))

    ids = x.reshape(T).astype(jnp.int32)

    # --- tile sizing (generation aware) -------------------------------------
    # Keep the double-buffered output tile under ~16 MiB so it fits v7x's
    # 64 MiB-per-TC VMEM with headroom; v5e/v6e (128 MiB) have plenty of slack.
    vmem_budget = 16 * 1024 * 1024
    max_rows = max(16, (vmem_budget // (2 * d_pad * itemsize)) // 16 * 16)
    tile_t = min(int(tile_t), max_rows, pl.cdiv(T, 16) * 16)
    # Feed both v7x TensorCores: keep >= 2 tiles whenever T allows it.
    if T >= 32:
        half = max(16, pl.cdiv(pl.cdiv(T, 2), 16) * 16)
        tile_t = min(tile_t, half)
    # Sublane-dense rows for both f32 and bf16 tables.
    tile_t = max(16, (tile_t // 16) * 16)
    num_tiles = pl.cdiv(T, tile_t)
    T_pad = num_tiles * tile_t

    kernel = functools.partial(
        _emb_gather_kernel, scale=scale, tile_t=tile_t, vocab=vocab,
        ring=dma_ring)

    grid_spec = pltpu.PrefetchScalarGridSpec(
        num_scalar_prefetch=1,                 # token ids -> SMEM once
        grid=(num_tiles,),                     # one grid step per token tile
        in_specs=[
            # Embedding table stays in HBM; rows are gathered by manual DMAs.
            pl.BlockSpec(memory_space=pl.ANY),
        ],
        out_specs=pl.BlockSpec((tile_t, d_pad), lambda i, ids_ref: (i, 0)),
        scratch_shapes=[pltpu.SemaphoreType.DMA((dma_ring,))],
    )

    bytes_accessed = 2 * T_pad * d_pad * itemsize + T * 4  # rows in + out + ids
    out = pl.pallas_call(
        kernel,
        out_shape=jax.ShapeDtypeStruct((T_pad, d_pad), emb_table.dtype),
        grid_spec=grid_spec,
        compiler_params=pltpu.CompilerParams(
            dimension_semantics=("parallel",),   # shard tiles across v7x TCs
            vmem_limit_bytes=32 * 1024 * 1024,   # safe on v5e/v6e/v7x
        ),
        cost_estimate=pl.CostEstimate(
            flops=T_pad * d_pad,                 # just the 1/sqrt(d_model) scale
            transcendentals=0,
            bytes_accessed=bytes_accessed,
        ),
    )(ids, table)

    return out[:T, :d_model].reshape(B, S, d_model)


if __name__ == "__main__":
    key = jax.random.PRNGKey(0)

    # --- small shape matching the Transformer embedding (B=2, S=8, d=32) ----
    B, S = 2, 8
    d_model, vocab = 32, 64
    k_ids, k_emb, k_ids2, k_emb2 = jax.random.split(key, 4)

    x = jax.random.randint(k_ids, (B, S), minval=0, maxval=vocab, dtype=jnp.int32)
    emb_table = jax.random.normal(k_emb, (vocab, d_model), dtype=jnp.float32)

    out = embedding_forward(x, emb_table)
    out = jax.block_until_ready(out)

    ref = jnp.take(emb_table, x, axis=0) / math.sqrt(d_model)
    assert out.shape == (B, S, d_model)
    assert jnp.allclose(out, ref, atol=1e-5, rtol=1e-5)

    # --- multi-tile case (exercises steady-state DMA ring + padded tail) ----
    B2, S2 = 3, 70
    d_model2, vocab2 = 48, 97
    x2 = jax.random.randint(k_ids2, (B2, S2), minval=0, maxval=vocab2,
                            dtype=jnp.int32)
    emb_table2 = jax.random.normal(k_emb2, (vocab2, d_model2), dtype=jnp.float32)

    out2 = embedding_forward(x2, emb_table2)
    out2 = jax.block_until_ready(out2)

    ref2 = jnp.take(emb_table2, x2, axis=0) / math.sqrt(d_model2)
    assert out2.shape == (B2, S2, d_model2)
    assert jnp.allclose(out2, ref2, atol=1e-5, rtol=1e-5)

    print("KERNEL_OK")
</pallas_src>

<mosaic_0001>
module attributes {stable_mosaic.version = 11 : i64} {
  func.func @_emb_gather_kernel(%arg0: i32, %arg1: memref<16xi32, #tpu.memory_space<smem>>, %arg2: memref<64x128xf32, #tpu.memory_space<any>>, %arg3: memref<16x128xf32, #tpu.memory_space<vmem>>, %arg4: memref<8x!tpu.dma_semaphore, #tpu.memory_space<semaphore_mem>>) attributes {dimension_semantics = [#tpu.dimension_semantics<parallel>], iteration_bounds = array<i64: 1>, scalar_prefetch = 1 : i64, scratch_operands = 1 : i64, tpu.core_type = #tpu.core_type<tc>, window_params = [{}, {transform_indices = @transform_1, window_bounds = array<i64: 16, 128>}]} {
    %c16_i32 = arith.constant 16 : i32
    %0 = arith.muli %arg0, %c16_i32 : i32
    %c0_i32 = arith.constant 0 : i32
    %1 = arith.addi %0, %c0_i32 : i32
    %c15_i32 = arith.constant 15 : i32
    %2 = arith.minsi %1, %c15_i32 : i32
    %3 = arith.index_cast %2 : i32 to index
    %4 = memref.load %arg1[%3] : memref<16xi32, #tpu.memory_space<smem>>
    %c0_i32_0 = arith.constant 0 : i32
    %c63_i32 = arith.constant 63 : i32
    %5 = arith.maxsi %c0_i32_0, %4 : i32
    %6 = arith.minsi %c63_i32, %5 : i32
    %c0_i32_1 = arith.constant 0 : i32
    %c0_i32_2 = arith.constant 0 : i32
    %7 = tpu.memref_slice %arg2[%6, %c0_i32_2] : memref<64x128xf32, #tpu.memory_space<any>> -> memref<1x128xf32, #tpu.memory_space<any>>
    %c0_i32_3 = arith.constant 0 : i32
    %c0_i32_4 = arith.constant 0 : i32
    %8 = tpu.memref_slice %arg3[%c0_i32_3, %c0_i32_4] : memref<16x128xf32, #tpu.memory_space<vmem>> -> memref<1x128xf32, #tpu.memory_space<vmem>>
    %9 = tpu.memref_slice %arg4[%c0_i32_1] : memref<8x!tpu.dma_semaphore, #tpu.memory_space<semaphore_mem>> -> memref<1x!tpu.dma_semaphore, #tpu.memory_space<semaphore_mem>>
    %10 = tpu.memref_squeeze %9 : memref<1x!tpu.dma_semaphore, #tpu.memory_space<semaphore_mem>> -> memref<!tpu.dma_semaphore, #tpu.memory_space<semaphore_mem>>
    tpu.enqueue_dma source(%7 : memref<1x128xf32, #tpu.memory_space<any>>) target(%8 : memref<1x128xf32, #tpu.memory_space<vmem>>) target_semaphore(%10 : memref<!tpu.dma_semaphore, #tpu.memory_space<semaphore_mem>>)
    %c1_i32 = arith.constant 1 : i32
    %11 = arith.addi %0, %c1_i32 : i32
    %c15_i32_5 = arith.constant 15 : i32
    %12 = arith.minsi %11, %c15_i32_5 : i32
    %13 = arith.index_cast %12 : i32 to index
    %14 = memref.load %arg1[%13] : memref<16xi32, #tpu.memory_space<smem>>
    %c0_i32_6 = arith.constant 0 : i32
    %c63_i32_7 = arith.constant 63 : i32
    %15 = arith.maxsi %c0_i32_6, %14 : i32
    %16 = arith.minsi %c63_i32_7, %15 : i32
    %c1_i32_8 = arith.constant 1 : i32
    %c0_i32_9 = arith.constant 0 : i32
    %17 = tpu.memref_slice %arg2[%16, %c0_i32_9] : memref<64x128xf32, #tpu.memory_space<any>> -> memref<1x128xf32, #tpu.memory_space<any>>
    %c1_i32_10 = arith.constant 1 : i32
    %c0_i32_11 = arith.constant 0 : i32
    %18 = tpu.memref_slice %arg3[%c1_i32_10, %c0_i32_11] : memref<16x128xf32, #tpu.memory_space<vmem>> -> memref<1x128xf32, #tpu.memory_space<vmem>>
    %19 = tpu.memref_slice %arg4[%c1_i32_8] : memref<8x!tpu.dma_semaphore, #tpu.memory_space<semaphore_mem>> -> memref<1x!tpu.dma_semaphore, #tpu.memory_space<semaphore_mem>>
    %20 = tpu.memref_squeeze %19 : memref<1x!tpu.dma_semaphore, #tpu.memory_space<semaphore_mem>> -> memref<!tpu.dma_semaphore, #tpu.memory_space<semaphore_mem>>
    tpu.enqueue_dma source(%17 : memref<1x128xf32, #tpu.memory_space<any>>) target(%18 : memref<1x128xf32, #tpu.memory_space<vmem>>) target_semaphore(%20 : memref<!tpu.dma_semaphore, #tpu.memory_space<semaphore_mem>>)
    %c2_i32 = arith.constant 2 : i32
    %21 = arith.addi %0, %c2_i32 : i32
    %c15_i32_12 = arith.constant 15 : i32
    %22 = arith.minsi %21, %c15_i32_12 : i32
    %23 = arith.index_cast %22 : i32 to index
    %24 = memref.load %arg1[%23] : memref<16xi32, #tpu.memory_space<smem>>
    %c0_i32_13 = arith.constant 0 : i32
    %c63_i32_14 = arith.constant 63 : i32
    %25 = arith.maxsi %c0_i32_13, %24 : i32
    %26 = arith.minsi %c63_i32_14, %25 : i32
    %c2_i32_15 = arith.constant 2 : i32
    %c0_i32_16 = arith.constant 0 : i32
    %27 = tpu.memref_slice %arg2[%26, %c0_i32_16] : memref<64x128xf32, #tpu.memory_space<any>> -> memref<1x128xf32, #tpu.memory_space<any>>
    %c2_i32_17 = arith.constant 2 : i32
    %c0_i32_18 = arith.constant 0 : i32
    %28 = tpu.memref_slice %arg3[%c2_i32_17, %c0_i32_18] : memref<16x128xf32, #tpu.memory_space<vmem>> -> memref<1x128xf32, #tpu.memory_space<vmem>>
    %29 = tpu.memref_slice %arg4[%c2_i32_15] : memref<8x!tpu.dma_semaphore, #tpu.memory_space<semaphore_mem>> -> memref<1x!tpu.dma_semaphore, #tpu.memory_space<semaphore_mem>>
    %30 = tpu.memref_squeeze %29 : memref<1x!tpu.dma_semaphore, #tpu.memory_space<semaphore_mem>> -> memref<!tpu.dma_semaphore, #tpu.memory_space<semaphore_mem>>
    tpu.enqueue_dma source(%27 : memref<1x128xf32, #tpu.memory_space<any>>) target(%28 : memref<1x128xf32, #tpu.memory_space<vmem>>) target_semaphore(%30 : memref<!tpu.dma_semaphore, #tpu.memory_space<semaphore_mem>>)
    %c3_i32 = arith.constant 3 : i32
    %31 = arith.addi %0, %c3_i32 : i32
    %c15_i32_19 = arith.constant 15 : i32
    %32 = arith.minsi %31, %c15_i32_19 : i32
    %33 = arith.index_cast %32 : i32 to index
    %34 = memref.load %arg1[%33] : memref<16xi32, #tpu.memory_space<smem>>
    %c0_i32_20 = arith.constant 0 : i32
    %c63_i32_21 = arith.constant 63 : i32
    %35 = arith.maxsi %c0_i32_20, %34 : i32
    %36 = arith.minsi %c63_i32_21, %35 : i32
    %c3_i32_22 = arith.constant 3 : i32
    %c0_i32_23 = arith.constant 0 : i32
    %37 = tpu.memref_slice %arg2[%36, %c0_i32_23] : memref<64x128xf32, #tpu.memory_space<any>> -> memref<1x128xf32, #tpu.memory_space<any>>
    %c3_i32_24 = arith.constant 3 : i32
    %c0_i32_25 = arith.constant 0 : i32
    %38 = tpu.memref_slice %arg3[%c3_i32_24, %c0_i32_25] : memref<16x128xf32, #tpu.memory_space<vmem>> -> memref<1x128xf32, #tpu.memory_space<vmem>>
    %39 = tpu.memref_slice %arg4[%c3_i32_22] : memref<8x!tpu.dma_semaphore, #tpu.memory_space<semaphore_mem>> -> memref<1x!tpu.dma_semaphore, #tpu.memory_space<semaphore_mem>>
    %40 = tpu.memref_squeeze %39 : memref<1x!tpu.dma_semaphore, #tpu.memory_space<semaphore_mem>> -> memref<!tpu.dma_semaphore, #tpu.memory_space<semaphore_mem>>
    tpu.enqueue_dma source(%37 : memref<1x128xf32, #tpu.memory_space<any>>) target(%38 : memref<1x128xf32, #tpu.memory_space<vmem>>) target_semaphore(%40 : memref<!tpu.dma_semaphore, #tpu.memory_space<semaphore_mem>>)
    %c4_i32 = arith.constant 4 : i32
    %41 = arith.addi %0, %c4_i32 : i32
    %c15_i32_26 = arith.constant 15 : i32
    %42 = arith.minsi %41, %c15_i32_26 : i32
    %43 = arith.index_cast %42 : i32 to index
    %44 = memref.load %arg1[%43] : memref<16xi32, #tpu.memory_space<smem>>
    %c0_i32_27 = arith.constant 0 : i32
    %c63_i32_28 = arith.constant 63 : i32
    %45 = arith.maxsi %c0_i32_27, %44 : i32
    %46 = arith.minsi %c63_i32_28, %45 : i32
    %c4_i32_29 = arith.constant 4 : i32
    %c0_i32_30 = arith.constant 0 : i32
    %47 = tpu.memref_slice %arg2[%46, %c0_i32_30] : memref<64x128xf32, #tpu.memory_space<any>> -> memref<1x128xf32, #tpu.memory_space<any>>
    %c4_i32_31 = arith.constant 4 : i32
    %c0_i32_32 = arith.constant 0 : i32
    %48 = tpu.memref_slice %arg3[%c4_i32_31, %c0_i32_32] : memref<16x128xf32, #tpu.memory_space<vmem>> -> memref<1x128xf32, #tpu.memory_space<vmem>>
    %49 = tpu.memref_slice %arg4[%c4_i32_29] : memref<8x!tpu.dma_semaphore, #tpu.memory_space<semaphore_mem>> -> memref<1x!tpu.dma_semaphore, #tpu.memory_space<semaphore_mem>>
    %50 = tpu.memref_squeeze %49 : memref<1x!tpu.dma_semaphore, #tpu.memory_space<semaphore_mem>> -> memref<!tpu.dma_semaphore, #tpu.memory_space<semaphore_mem>>
    tpu.enqueue_dma source(%47 : memref<1x128xf32, #tpu.memory_space<any>>) target(%48 : memref<1x128xf32, #tpu.memory_space<vmem>>) target_semaphore(%50 : memref<!tpu.dma_semaphore, #tpu.memory_space<semaphore_mem>>)
    %c5_i32 = arith.constant 5 : i32
    %51 = arith.addi %0, %c5_i32 : i32
    %c15_i32_33 = arith.constant 15 : i32
    %52 = arith.minsi %51, %c15_i32_33 : i32
    %53 = arith.index_cast %52 : i32 to index
    %54 = memref.load %arg1[%53] : memref<16xi32, #tpu.memory_space<smem>>
    %c0_i32_34 = arith.constant 0 : i32
    %c63_i32_35 = arith.constant 63 : i32
    %55 = arith.maxsi %c0_i32_34, %54 : i32
    %56 = arith.minsi %c63_i32_35, %55 : i32
    %c5_i32_36 = arith.constant 5 : i32
    %c0_i32_37 = arith.constant 0 : i32
    %57 = tpu.memref_slice %arg2[%56, %c0_i32_37] : memref<64x128xf32, #tpu.memory_space<any>> -> memref<1x128xf32, #tpu.memory_space<any>>
    %c5_i32_38 = arith.constant 5 : i32
    %c0_i32_39 = arith.constant 0 : i32
    %58 = tpu.memref_slice %arg3[%c5_i32_38, %c0_i32_39] : memref<16x128xf32, #tpu.memory_space<vmem>> -> memref<1x128xf32, #tpu.memory_space<vmem>>
    %59 = tpu.memref_slice %arg4[%c5_i32_36] : memref<8x!tpu.dma_semaphore, #tpu.memory_space<semaphore_mem>> -> memref<1x!tpu.dma_semaphore, #tpu.memory_space<semaphore_mem>>
    %60 = tpu.memref_squeeze %59 : memref<1x!tpu.dma_semaphore, #tpu.memory_space<semaphore_mem>> -> memref<!tpu.dma_semaphore, #tpu.memory_space<semaphore_mem>>
    tpu.enqueue_dma source(%57 : memref<1x128xf32, #tpu.memory_space<any>>) target(%58 : memref<1x128xf32, #tpu.memory_space<vmem>>) target_semaphore(%60 : memref<!tpu.dma_semaphore, #tpu.memory_space<semaphore_mem>>)
    %c6_i32 = arith.constant 6 : i32
    %61 = arith.addi %0, %c6_i32 : i32
    %c15_i32_40 = arith.constant 15 : i32
    %62 = arith.minsi %61, %c15_i32_40 : i32
    %63 = arith.index_cast %62 : i32 to index
    %64 = memref.load %arg1[%63] : memref<16xi32, #tpu.memory_space<smem>>
    %c0_i32_41 = arith.constant 0 : i32
    %c63_i32_42 = arith.constant 63 : i32
    %65 = arith.maxsi %c0_i32_41, %64 : i32
    %66 = arith.minsi %c63_i32_42, %65 : i32
    %c6_i32_43 = arith.constant 6 : i32
    %c0_i32_44 = arith.constant 0 : i32
    %67 = tpu.memref_slice %arg2[%66, %c0_i32_44] : memref<64x128xf32, #tpu.memory_space<any>> -> memref<1x128xf32, #tpu.memory_space<any>>
    %c6_i32_45 = arith.constant 6 : i32
    %c0_i32_46 = arith.constant 0 : i32
    %68 = tpu.memref_slice %arg3[%c6_i32_45, %c0_i32_46] : memref<16x128xf32, #tpu.memory_space<vmem>> -> memref<1x128xf32, #tpu.memory_space<vmem>>
    %69 = tpu.memref_slice %arg4[%c6_i32_43] : memref<8x!tpu.dma_semaphore, #tpu.memory_space<semaphore_mem>> -> memref<1x!tpu.dma_semaphore, #tpu.memory_space<semaphore_mem>>
    %70 = tpu.memref_squeeze %69 : memref<1x!tpu.dma_semaphore, #tpu.memory_space<semaphore_mem>> -> memref<!tpu.dma_semaphore, #tpu.memory_space<semaphore_mem>>
    tpu.enqueue_dma source(%67 : memref<1x128xf32, #tpu.memory_space<any>>) target(%68 : memref<1x128xf32, #tpu.memory_space<vmem>>) target_semaphore(%70 : memref<!tpu.dma_semaphore, #tpu.memory_space<semaphore_mem>>)
    %c7_i32 = arith.constant 7 : i32
    %71 = arith.addi %0, %c7_i32 : i32
    %c15_i32_47 = arith.constant 15 : i32
    %72 = arith.minsi %71, %c15_i32_47 : i32
    %73 = arith.index_cast %72 : i32 to index
    %74 = memref.load %arg1[%73] : memref<16xi32, #tpu.memory_space<smem>>
    %c0_i32_48 = arith.constant 0 : i32
    %c63_i32_49 = arith.constant 63 : i32
    %75 = arith.maxsi %c0_i32_48, %74 : i32
    %76 = arith.minsi %c63_i32_49, %75 : i32
    %c7_i32_50 = arith.constant 7 : i32
    %c0_i32_51 = arith.constant 0 : i32
    %77 = tpu.memref_slice %arg2[%76, %c0_i32_51] : memref<64x128xf32, #tpu.memory_space<any>> -> memref<1x128xf32, #tpu.memory_space<any>>
    %c7_i32_52 = arith.constant 7 : i32
    %c0_i32_53 = arith.constant 0 : i32
    %78 = tpu.memref_slice %arg3[%c7_i32_52, %c0_i32_53] : memref<16x128xf32, #tpu.memory_space<vmem>> -> memref<1x128xf32, #tpu.memory_space<vmem>>
    %79 = tpu.memref_slice %arg4[%c7_i32_50] : memref<8x!tpu.dma_semaphore, #tpu.memory_space<semaphore_mem>> -> memref<1x!tpu.dma_semaphore, #tpu.memory_space<semaphore_mem>>
    %80 = tpu.memref_squeeze %79 : memref<1x!tpu.dma_semaphore, #tpu.memory_space<semaphore_mem>> -> memref<!tpu.dma_semaphore, #tpu.memory_space<semaphore_mem>>
    tpu.enqueue_dma source(%77 : memref<1x128xf32, #tpu.memory_space<any>>) target(%78 : memref<1x128xf32, #tpu.memory_space<vmem>>) target_semaphore(%80 : memref<!tpu.dma_semaphore, #tpu.memory_space<semaphore_mem>>)
    %c0_i32_54 = arith.constant 0 : i32
    %c8_i32 = arith.constant 8 : i32
    %81 = arith.addi %c0_i32_54, %c8_i32 : i32
    %c1_i32_55 = arith.constant 1 : i32
    scf.for %arg5 = %c0_i32_54 to %81 step %c1_i32_55  : i32 {
      %c1_i32_64 = arith.constant 1 : i32
      %87 = arith.muli %arg5, %c1_i32_64 : i32
      %c0_i32_65 = arith.constant 0 : i32
      %88 = arith.addi %c0_i32_65, %87 : i32
      %89 = arith.addi %0, %88 : i32
      %c15_i32_66 = arith.constant 15 : i32
      %90 = arith.minsi %89, %c15_i32_66 : i32
      %91 = arith.index_cast %90 : i32 to index
      %92 = memref.load %arg1[%91] : memref<16xi32, #tpu.memory_space<smem>>
      %c0_i32_67 = arith.constant 0 : i32
      %c63_i32_68 = arith.constant 63 : i32
      %93 = arith.maxsi %c0_i32_67, %92 : i32
      %94 = arith.minsi %c63_i32_68, %93 : i32
      %c7_i32_69 = arith.constant 7 : i32
      %95 = arith.andi %88, %c7_i32_69 : i32
      %c0_i32_70 = arith.constant 0 : i32
      %96 = tpu.memref_slice %arg2[%94, %c0_i32_70] : memref<64x128xf32, #tpu.memory_space<any>> -> memref<1x128xf32, #tpu.memory_space<any>>
      %c0_i32_71 = arith.constant 0 : i32
      %97 = tpu.memref_slice %arg3[%88, %c0_i32_71] : memref<16x128xf32, #tpu.memory_space<vmem>> -> memref<1x128xf32, #tpu.memory_space<vmem>>
      %98 = tpu.memref_slice %arg4[%95] : memref<8x!tpu.dma_semaphore, #tpu.memory_space<semaphore_mem>> -> memref<1x!tpu.dma_semaphore, #tpu.memory_space<semaphore_mem>>
      %99 = tpu.memref_squeeze %98 : memref<1x!tpu.dma_semaphore, #tpu.memory_space<semaphore_mem>> -> memref<!tpu.dma_semaphore, #tpu.memory_space<semaphore_mem>>
      tpu.wait_dma2 semaphore(%99 : memref<!tpu.dma_semaphore, #tpu.memory_space<semaphore_mem>>) src(%96 : memref<1x128xf32, #tpu.memory_space<any>>) dst(%97 : memref<1x128xf32, #tpu.memory_space<vmem>>)
      %c8_i32_72 = arith.constant 8 : i32
      %100 = arith.addi %88, %c8_i32_72 : i32
      %101 = arith.addi %0, %100 : i32
      %c15_i32_73 = arith.constant 15 : i32
      %102 = arith.minsi %101, %c15_i32_73 : i32
      %103 = arith.index_cast %102 : i32 to index
      %104 = memref.load %arg1[%103] : memref<16xi32, #tpu.memory_space<smem>>
      %c0_i32_74 = arith.constant 0 : i32
      %c63_i32_75 = arith.constant 63 : i32
      %105 = arith.maxsi %c0_i32_74, %104 : i32
      %106 = arith.minsi %c63_i32_75, %105 : i32
      %c7_i32_76 = arith.constant 7 : i32
      %107 = arith.andi %100, %c7_i32_76 : i32
      %c0_i32_77 = arith.constant 0 : i32
      %108 = tpu.memref_slice %arg2[%106, %c0_i32_77] : memref<64x128xf32, #tpu.memory_space<any>> -> memref<1x128xf32, #tpu.memory_space<any>>
      %c0_i32_78 = arith.constant 0 : i32
      %109 = tpu.memref_slice %arg3[%100, %c0_i32_78] : memref<16x128xf32, #tpu.memory_space<vmem>> -> memref<1x128xf32, #tpu.memory_space<vmem>>
      %110 = tpu.memref_slice %arg4[%107] : memref<8x!tpu.dma_semaphore, #tpu.memory_space<semaphore_mem>> -> memref<1x!tpu.dma_semaphore, #tpu.memory_space<semaphore_mem>>
      %111 = tpu.memref_squeeze %110 : memref<1x!tpu.dma_semaphore, #tpu.memory_space<semaphore_mem>> -> memref<!tpu.dma_semaphore, #tpu.memory_space<semaphore_mem>>
      tpu.enqueue_dma source(%108 : memref<1x128xf32, #tpu.memory_space<any>>) target(%109 : memref<1x128xf32, #tpu.memory_space<vmem>>) target_semaphore(%111 : memref<!tpu.dma_semaphore, #tpu.memory_space<semaphore_mem>>)
    }
    %c8_i32_56 = arith.constant 8 : i32
    %c0_i32_57 = arith.constant 0 : i32
    %c8_i32_58 = arith.constant 8 : i32
    %82 = arith.addi %c0_i32_57, %c8_i32_58 : i32
    %c1_i32_59 = arith.constant 1 : i32
    scf.for %arg5 = %c0_i32_57 to %82 step %c1_i32_59  : i32 {
      %c1_i32_64 = arith.constant 1 : i32
      %87 = arith.muli %arg5, %c1_i32_64 : i32
      %c8_i32_65 = arith.constant 8 : i32
      %88 = arith.addi %c8_i32_65, %87 : i32
      %89 = arith.addi %0, %88 : i32
      %c15_i32_66 = arith.constant 15 : i32
      %90 = arith.minsi %89, %c15_i32_66 : i32
      %91 = arith.index_cast %90 : i32 to index
      %92 = memref.load %arg1[%91] : memref<16xi32, #tpu.memory_space<smem>>
      %c0_i32_67 = arith.constant 0 : i32
      %c63_i32_68 = arith.constant 63 : i32
      %93 = arith.maxsi %c0_i32_67, %92 : i32
      %94 = arith.minsi %c63_i32_68, %93 : i32
      %c7_i32_69 = arith.constant 7 : i32
      %95 = arith.andi %88, %c7_i32_69 : i32
      %c0_i32_70 = arith.constant 0 : i32
      %96 = tpu.memref_slice %arg2[%94, %c0_i32_70] : memref<64x128xf32, #tpu.memory_space<any>> -> memref<1x128xf32, #tpu.memory_space<any>>
      %c0_i32_71 = arith.constant 0 : i32
      %97 = tpu.memref_slice %arg3[%88, %c0_i32_71] : memref<16x128xf32, #tpu.memory_space<vmem>> -> memref<1x128xf32, #tpu.memory_space<vmem>>
      %98 = tpu.memref_slice %arg4[%95] : memref<8x!tpu.dma_semaphore, #tpu.memory_space<semaphore_mem>> -> memref<1x!tpu.dma_semaphore, #tpu.memory_space<semaphore_mem>>
      %99 = tpu.memref_squeeze %98 : memref<1x!tpu.dma_semaphore, #tpu.memory_space<semaphore_mem>> -> memref<!tpu.dma_semaphore, #tpu.memory_space<semaphore_mem>>
      tpu.wait_dma2 semaphore(%99 : memref<!tpu.dma_semaphore, #tpu.memory_space<semaphore_mem>>) src(%96 : memref<1x128xf32, #tpu.memory_space<any>>) dst(%97 : memref<1x128xf32, #tpu.memory_space<vmem>>)
    }
    %c8_i32_60 = arith.constant 8 : i32
    %c0 = arith.constant 0 : index
    %c0_61 = arith.constant 0 : index
    %83 = vector.load %arg3[%c0, %c0_61] : memref<16x128xf32, #tpu.memory_space<vmem>>, vector<16x128xf32>
    %cst = arith.constant 0.176776692 : f32
    %84 = vector.broadcast %cst : f32 to vector<16x128xf32>
    %85 = arith.mulf %83, %84 : vector<16x128xf32>
    %c0_62 = arith.constant 0 : index
    %c0_63 = arith.constant 0 : index
    %86 = vector.load %arg3[%c0_62, %c0_63] : memref<16x128xf32, #tpu.memory_space<vmem>>, vector<16x128xf32>
    tpu.vector_store %arg3[%c0_62, %c0_63], %85 {strides = array<i32>} : memref<16x128xf32, #tpu.memory_space<vmem>>, vector<16x128xf32>,
    return
  }
  func.func @transform_1(%arg0: i32, %arg1: memref<16xi32, #tpu.memory_space<smem>>) -> (i32, i32) {
    %c0_i32 = arith.constant 0 : i32
    %c0_i32_0 = arith.constant 0 : i32
    return %arg0, %c0_i32 : i32, i32
  }
}

</mosaic_0001>

<llo_original>
// kernel: tpu_custom_call.1
$region0: #{tpu_custom_call.1}
  #allocation0 [shape = 'u32[]', space=smem, size = 0x4, offset = 0x4, fixed_abs, tag = 'smem constant byte address 0x4 - core index']
  #allocation1 [shape = 'u32[72,128]{1,0:T(1,128)}', space=vmem, size = 0x9000, scoped, tag = 'internal scratch']
  #allocation2 [shape = 's32[8]{0}', space=sflag, size = 0x20, scoped, tag = 'scratch operand']
  #allocation3 [shape = 's32[1]{0}', space=sflag, size = 0x4, scoped, tag = 'scoped memory for tpu_custom_call.1']
  #allocation4 [shape = 'u8[512]{0}', space=smem, size = 0x200, scoped, tag = 'prefetched SMEM operand 0']
  #allocation7 [shape = 's32[]', space=sflag, size = 0x4, offset = 0, fixed_abs, tag = 'sflag constant byte address 0x0 - dummy sync flag']
  #allocation8 [shape = 's32[]', space=sflag, size = 0x4, offset = 0, fixed_abs, tag = 'sflag constant byte address 0x0 - dummy sync flag']
  #allocation9 [shape = 'u32[]', space=smem, size = 0x4, offset = 0x44, fixed_abs, tag = 'smem constant byte address 0x44 - assertion arg 0']
  #allocation10 [shape = 'u32[]', space=smem, size = 0x4, offset = 0x48, fixed_abs, tag = 'smem constant byte address 0x48 - assertion arg 1']
  #allocation11 [shape = 's32[]', space=sflag, size = 0x4, offset = 0, fixed_abs, tag = 'sflag constant byte address 0x0 - dummy sync flag']
  #allocation12 [shape = 's32[]', space=sflag, size = 0x4, offset = 0, fixed_abs, tag = 'sflag constant byte address 0x0 - dummy sync flag']
  #allocation13 [shape = 's32[]', space=sflag, size = 0x4, offset = 0, fixed_abs, tag = 'sflag constant byte address 0x0 - dummy sync flag']
  #allocation14 [shape = 's32[]', space=sflag, size = 0x4, offset = 0, fixed_abs, tag = 'sflag constant byte address 0x0 - dummy sync flag']
  #allocation15 [shape = 's32[]', space=sflag, size = 0x4, offset = 0, fixed_abs, tag = 'sflag constant byte address 0x0 - dummy sync flag']
  #allocation16 [shape = 's32[]', space=sflag, size = 0x4, offset = 0, fixed_abs, tag = 'sflag constant byte address 0x0 - dummy sync flag']
  #allocation17 [shape = 's32[]', space=sflag, size = 0x4, offset = 0, fixed_abs, tag = 'sflag constant byte address 0x0 - dummy sync flag']
  #allocation18 [shape = 's32[]', space=sflag, size = 0x4, offset = 0, fixed_abs, tag = 'sflag constant byte address 0x0 - dummy sync flag']
  #allocation19 [shape = 's32[]', space=sflag, size = 0x4, offset = 0, fixed_abs, tag = 'sflag constant byte address 0x0 - dummy sync flag']
  #allocation20 [shape = 's32[]', space=sflag, size = 0x4, offset = 0, fixed_abs, tag = 'sflag constant byte address 0x0 - dummy sync flag']
  #allocation21 [shape = 's32[]', space=sflag, size = 0x4, offset = 0, fixed_abs, tag = 'sflag constant byte address 0x0 - dummy sync flag']
  #allocation22 [shape = 's32[]', space=sflag, size = 0x4, offset = 0, fixed_abs, tag = 'sflag constant byte address 0x0 - dummy sync flag']
  #allocation23 [shape = 's32[]', space=sflag, size = 0x4, offset = 0, fixed_abs, tag = 'sflag constant byte address 0x0 - dummy sync flag']
  #allocation24 [shape = 's32[]', space=sflag, size = 0x4, offset = 0, fixed_abs, tag = 'sflag constant byte address 0x0 - dummy sync flag']
  #allocation25 [shape = 's32[]', space=sflag, size = 0x4, offset = 0, fixed_abs, tag = 'sflag constant byte address 0x0 - dummy sync flag']
  #allocation26 [shape = 's32[]', space=sflag, size = 0x4, offset = 0, fixed_abs, tag = 'sflag constant byte address 0x0 - dummy sync flag']
  %s0 = inlined_call_operand.hbm [shape: s32[16], index: 0, kind: input, shape index: {}]
  %s1 = inlined_call_operand.hbm [shape: f32[64,128], index: 1, kind: input, shape index: {}]
  %s2 = inlined_call_operand.hbm [shape: f32[16,128], index: 2, kind: output, shape index: {}]
  %s3 = sld [smem:[#allocation0]]
  $region60: #{tpu_custom_call.1} parent=0
    _
  %s5 = ssub.s32 1, %s3
  %s6 = scalar_select 0, %s5, %s3
  %s8 = sshll.u32 %s0, 4
  %s9 = int_to_ptr.hbm [resolvable:$true] %s8
  %11 = dma.hbm_to_smem %s9, 16, [#allocation4], [#allocation3]
  %13 = dma.done [#allocation3], 16
  %14 = sfence
  $region1: #{tpu_custom_call.1} parent=0
    #allocation5 [shape = 'u8[8192]{0}', space=vmem, size = 0x2000, scoped, tag = 'output window, operand 0, single buffered']
    #allocation6 [shape = 's32[1]{0}', space=sflag, size = 0x4, scoped, tag = 'scoped memory for tpu_custom_call.1']
    %15 = vsyncpa [#allocation6], 0
    %s16 = smul.u32 0, 16
    %p17 = scmp.lt.s32.totalorder %s16, 15
    %s18 = scalar_select %p17, %s16, 15
    %s19 = sld [smem:[#allocation4 + %s18]]
    %p20 = scmp.gt.s32.totalorder %s19, 0
    %s21 = scalar_select %p20, %s19, 0
    %p22 = scmp.lt.s32.totalorder %s21, 63
    %s23 = scalar_select %p22, %s21, 63
    %s24 = scalar_lea.hbm %s1, %s23
    // Predicated region
    $region2: #{tpu_custom_call.1} parent=1 // pred_check
      _
    $region3: #{tpu_custom_call.1} parent=1 // pred_check_branch
      %26 = sbr.rel target = $region5
    $region4: #{tpu_custom_call.1} parent=1 // pred_region
      %27 = sst [smem:[#allocation9]] [#allocation8]
      %28 = sst [smem:[#allocation10]] [#allocation7]
    $region5: #{tpu_custom_call.1} parent=1 // pred_fallthru
      _
    %30 = shalt.err (0)
    %s32 = sshll.u32 %s24, 4
    %s33 = int_to_ptr.hbm [resolvable:$true] %s32
    %s34 = sshll.u32 [#allocation5], 4
    %s35 = int_to_ptr.vmem [resolvable:$true] %s34
    %37 = dma.hbm_to_vmem [thread:$0]  %s33, 16, %s35, [#allocation2]
    %s38 = sadd.s32 %s16, 1
    %p39 = scmp.lt.s32.totalorder %s38, 15
    %s40 = scalar_select %p39, %s38, 15
    %s41 = sld [smem:[#allocation4 + %s40]]
    %p42 = scmp.gt.s32.totalorder %s41, 0
    %s43 = scalar_select %p42, %s41, 0
    %p44 = scmp.lt.s32.totalorder %s43, 63
    %s45 = scalar_select %p44, %s43, 63
    %s46 = scalar_lea.hbm %s1, %s45
    %s47 = scalar_lea.vmem [#allocation5], 1
    %s48 = scalar_lea.sflag [#allocation2], 1
    // Predicated region
    $region6: #{tpu_custom_call.1} parent=1 // pred_check
      _
    $region7: #{tpu_custom_call.1} parent=1 // pred_check_branch
      %50 = sbr.rel target = $region9
    $region8: #{tpu_custom_call.1} parent=1 // pred_region
      %51 = sst [smem:[#allocation9]] [#allocation12]
      %52 = sst [smem:[#allocation10]] [#allocation11]
    $region9: #{tpu_custom_call.1} parent=1 // pred_fallthru
      _
    %54 = shalt.err (0)
    %s56 = sshll.u32 %s46, 4
    %s57 = int_to_ptr.hbm [resolvable:$true] %s56
    %s58 = sshll.u32 %s47, 4
    %s59 = int_to_ptr.vmem [resolvable:$true] %s58
    %61 = dma.hbm_to_vmem [thread:$0]  %s57, 16, %s59, %s48
    %s62 = sadd.s32 %s16, 2
    %p63 = scmp.lt.s32.totalorder %s62, 15
    %s64 = scalar_select %p63, %s62, 15
    %s65 = sld [smem:[#allocation4 + %s64]]
    %p66 = scmp.gt.s32.totalorder %s65, 0
    %s67 = scalar_select %p66, %s65, 0
    %p68 = scmp.lt.s32.totalorder %s67, 63
    %s69 = scalar_select %p68, %s67, 63
    %s70 = scalar_lea.hbm %s1, %s69
    %s71 = scalar_lea.vmem [#allocation5], 2
    %s72 = scalar_lea.sflag [#allocation2], 2
    // Predicated region
    $region10: #{tpu_custom_call.1} parent=1 // pred_check
      _
    $region11: #{tpu_custom_call.1} parent=1 // pred_check_branch
      %74 = sbr.rel target = $region13
    $region12: #{tpu_custom_call.1} parent=1 // pred_region
      %75 = sst [smem:[#allocation9]] [#allocation14]
      %76 = sst [smem:[#allocation10]] [#allocation13]
    $region13: #{tpu_custom_call.1} parent=1 // pred_fallthru
      _
    %78 = shalt.err (0)
    %s80 = sshll.u32 %s70, 4
    %s81 = int_to_ptr.hbm [resolvable:$true] %s80
    %s82 = sshll.u32 %s71, 4
    %s83 = int_to_ptr.vmem [resolvable:$true] %s82
    %85 = dma.hbm_to_vmem [thread:$0]  %s81, 16, %s83, %s72
    %s86 = sadd.s32 %s16, 3
    %p87 = scmp.lt.s32.totalorder %s86, 15
    %s88 = scalar_select %p87, %s86, 15
    %s89 = sld [smem:[#allocation4 + %s88]]
    %p90 = scmp.gt.s32.totalorder %s89, 0
    %s91 = scalar_select %p90, %s89, 0
    %p92 = scmp.lt.s32.totalorder %s91, 63
    %s93 = scalar_select %p92, %s91, 63
    %s94 = scalar_lea.hbm %s1, %s93
    %s95 = scalar_lea.vmem [#allocation5], 3
    %s96 = scalar_lea.sflag [#allocation2], 3
    // Predicated region
    $region14: #{tpu_custom_call.1} parent=1 // pred_check
      _
    $region15: #{tpu_custom_call.1} parent=1 // pred_check_branch
      %98 = sbr.rel target = $region17
    $region16: #{tpu_custom_call.1} parent=1 // pred_region
      %99 = sst [smem:[#allocation9]] [#allocation16]
      %100 = sst [smem:[#allocation10]] [#allocation15]
    $region17: #{tpu_custom_call.1} parent=1 // pred_fallthru
      _
    %102 = shalt.err (0)
    %s104 = sshll.u32 %s94, 4
    %s105 = int_to_ptr.hbm [resolvable:$true] %s104
    %s106 = sshll.u32 %s95, 4
    %s107 = int_to_ptr.vmem [resolvable:$true] %s106
    %109 = dma.hbm_to_vmem [thread:$0]  %s105, 16, %s107, %s96
    %s110 = sadd.s32 %s16, 4
    %p111 = scmp.lt.s32.totalorder %s110, 15
    %s112 = scalar_select %p111, %s110, 15
    %s113 = sld [smem:[#allocation4 + %s112]]
    %p114 = scmp.gt.s32.totalorder %s113, 0
    %s115 = scalar_select %p114, %s113, 0
    %p116 = scmp.lt.s32.totalorder %s115, 63
    %s117 = scalar_select %p116, %s115, 63
    %s118 = scalar_lea.hbm %s1, %s117
    %s119 = scalar_lea.vmem [#allocation5], 4
    %s120 = scalar_lea.sflag [#allocation2], 4
    // Predicated region
    $region18: #{tpu_custom_call.1} parent=1 // pred_check
      _
    $region19: #{tpu_custom_call.1} parent=1 // pred_check_branch
      %122 = sbr.rel target = $region21
    $region20: #{tpu_custom_call.1} parent=1 // pred_region
      %123 = sst [smem:[#allocation9]] [#allocation18]
      %124 = sst [smem:[#allocation10]] [#allocation17]
    $region21: #{tpu_custom_call.1} parent=1 // pred_fallthru
      _
    %126 = shalt.err (0)
    %s128 = sshll.u32 %s118, 4
    %s129 = int_to_ptr.hbm [resolvable:$true] %s128
    %s130 = sshll.u32 %s119, 4
    %s131 = int_to_ptr.vmem [resolvable:$true] %s130
    %133 = dma.hbm_to_vmem [thread:$0]  %s129, 16, %s131, %s120
    %s134 = sadd.s32 %s16, 5
    %p135 = scmp.lt.s32.totalorder %s134, 15
    %s136 = scalar_select %p135, %s134, 15
    %s137 = sld [smem:[#allocation4 + %s136]]
    %p138 = scmp.gt.s32.totalorder %s137, 0
    %s139 = scalar_select %p138, %s137, 0
    %p140 = scmp.lt.s32.totalorder %s139, 63
    %s141 = scalar_select %p140, %s139, 63
    %s142 = scalar_lea.hbm %s1, %s141
    %s143 = scalar_lea.vmem [#allocation5], 5
    %s144 = scalar_lea.sflag [#allocation2], 5
    // Predicated region
    $region22: #{tpu_custom_call.1} parent=1 // pred_check
      _
    $region23: #{tpu_custom_call.1} parent=1 // pred_check_branch
      %146 = sbr.rel target = $region25
    $region24: #{tpu_custom_call.1} parent=1 // pred_region
      %147 = sst [smem:[#allocation9]] [#allocation20]
      %148 = sst [smem:[#allocation10]] [#allocation19]
    $region25: #{tpu_custom_call.1} parent=1 // pred_fallthru
      _
    %150 = shalt.err (0)
    %s152 = sshll.u32 %s142, 4
    %s153 = int_to_ptr.hbm [resolvable:$true] %s152
    %s154 = sshll.u32 %s143, 4
    %s155 = int_to_ptr.vmem [resolvable:$true] %s154
    %157 = dma.hbm_to_vmem [thread:$0]  %s153, 16, %s155, %s144
    %s158 = sadd.s32 %s16, 6
    %p159 = scmp.lt.s32.totalorder %s158, 15
    %s160 = scalar_select %p159, %s158, 15
    %s161 = sld [smem:[#allocation4 + %s160]]
    %p162 = scmp.gt.s32.totalorder %s161, 0
    %s163 = scalar_select %p162, %s161, 0
    %p164 = scmp.lt.s32.totalorder %s163, 63
    %s165 = scalar_select %p164, %s163, 63
    %s166 = scalar_lea.hbm %s1, %s165
    %s167 = scalar_lea.vmem [#allocation5], 6
    %s168 = scalar_lea.sflag [#allocation2], 6
    // Predicated region
    $region26: #{tpu_custom_call.1} parent=1 // pred_check
      _
    $region27: #{tpu_custom_call.1} parent=1 // pred_check_branch
      %170 = sbr.rel target = $region29
    $region28: #{tpu_custom_call.1} parent=1 // pred_region
      %171 = sst [smem:[#allocation9]] [#allocation22]
      %172 = sst [smem:[#allocation10]] [#allocation21]
    $region29: #{tpu_custom_call.1} parent=1 // pred_fallthru
      _
    %174 = shalt.err (0)
    %s176 = sshll.u32 %s166, 4
    %s177 = int_to_ptr.hbm [resolvable:$true] %s176
    %s178 = sshll.u32 %s167, 4
    %s179 = int_to_ptr.vmem [resolvable:$true] %s178
    %181 = dma.hbm_to_vmem [thread:$0]  %s177, 16, %s179, %s168
    %s182 = sadd.s32 %s16, 7
    %p183 = scmp.lt.s32.totalorder %s182, 15
    %s184 = scalar_select %p183, %s182, 15
    %s185 = sld [smem:[#allocation4 + %s184]]
    %p186 = scmp.gt.s32.totalorder %s185, 0
    %s187 = scalar_select %p186, %s185, 0
    %p188 = scmp.lt.s32.totalorder %s187, 63
    %s189 = scalar_select %p188, %s187, 63
    %s190 = scalar_lea.hbm %s1, %s189
    %s191 = scalar_lea.vmem [#allocation5], 7
    %s192 = scalar_lea.sflag [#allocation2], 7
    // Predicated region
    $region30: #{tpu_custom_call.1} parent=1 // pred_check
      _
    $region31: #{tpu_custom_call.1} parent=1 // pred_check_branch
      %194 = sbr.rel target = $region33
    $region32: #{tpu_custom_call.1} parent=1 // pred_region
      %195 = sst [smem:[#allocation9]] [#allocation24]
      %196 = sst [smem:[#allocation10]] [#allocation23]
    $region33: #{tpu_custom_call.1} parent=1 // pred_fallthru
      _
    %198 = shalt.err (0)
    %s200 = sshll.u32 %s190, 4
    %s201 = int_to_ptr.hbm [resolvable:$true] %s200
    %s202 = sshll.u32 %s191, 4
    %s203 = int_to_ptr.vmem [resolvable:$true] %s202
    %205 = dma.hbm_to_vmem [thread:$0]  %s201, 16, %s203, %s192
    loop: start=0, step=1, limit=8
    $region34: #{tpu_custom_call.1} parent=1 // loop_pre_header
      _
    $region35: #{tpu_custom_call.1} parent=1 // loop_header
      %s207 = sphi 0, %s211
      %p208 = scmp.ge.s32.totalorder %s207, 8
    $region36: #{tpu_custom_call.1} parent=1 // loop_header_branch
      %210 = sbr.rel (%p208) target = $region40
    $region37: #{tpu_custom_call.1} parent=1 // loop_body
      %s212 = sadd.s32 %s16, %s207
      %p213 = scmp.lt.s32.totalorder %s212, 15
      %s214 = scalar_select %p213, %s212, 15
      %s215 = sld [smem:[#allocation4 + %s214]]
      %s216 = sand.u32 %s207, 7
      %s217 = scalar_lea.sflag [#allocation2], %s216
      %s218 = smul.u32 1, 1
      %s219 = sshll.u32 %s218, 4
      %220 = dma.done %s217, %s219
      %s221 = sadd.s32 %s207, 8
      %s222 = sadd.s32 %s16, %s221
      %p223 = scmp.lt.s32.totalorder %s222, 15
      %s224 = scalar_select %p223, %s222, 15
      %s225 = sld [smem:[#allocation4 + %s224]]
      %p226 = scmp.gt.s32.totalorder %s225, 0
      %s227 = scalar_select %p226, %s225, 0
      %p228 = scmp.lt.s32.totalorder %s227, 63
      %s229 = scalar_select %p228, %s227, 63
      %s230 = sand.u32 %s221, 7
      %s231 = scalar_lea.hbm %s1, %s229
      %s232 = scalar_lea.vmem [#allocation5], %s221
      %s233 = scalar_lea.sflag [#allocation2], %s230
      // Predicated region
      $region41: #{tpu_custom_call.1} parent=37 // pred_check
        _
      $region42: #{tpu_custom_call.1} parent=37 // pred_check_branch
        %235 = sbr.rel target = $region44
      $region43: #{tpu_custom_call.1} parent=37 // pred_region
        %236 = sst [smem:[#allocation9]] [#allocation26]
        %237 = sst [smem:[#allocation10]] [#allocation25]
      $region44: #{tpu_custom_call.1} parent=37 // pred_fallthru
        _
      %239 = shalt.err (0)
      %s241 = sshll.u32 %s231, 4
      %s242 = int_to_ptr.hbm [resolvable:$true] %s241
      %s243 = sshll.u32 %s232, 4
      %s244 = int_to_ptr.vmem [resolvable:$true] %s243
      %246 = dma.hbm_to_vmem [thread:$0]  %s242, 16, %s244, %s233
    $region38: #{tpu_custom_call.1} parent=1 // loop_footer
      %s211 = sadd.s32 1, %s207
    $region39: #{tpu_custom_call.1} parent=1 // loop_footer_branch
      %206 = sbr.rel target = $region35
    $region40: #{tpu_custom_call.1} parent=1 // loop_exit
      _
    loop: start=0, step=1, limit=8
    $region45: #{tpu_custom_call.1} parent=1 // loop_pre_header
      _
    $region46: #{tpu_custom_call.1} parent=1 // loop_header
      %s248 = sphi 0, %s252
      %p249 = scmp.ge.s32.totalorder %s248, 8
    $region47: #{tpu_custom_call.1} parent=1 // loop_header_branch
      %251 = sbr.rel (%p249) target = $region51
    $region48: #{tpu_custom_call.1} parent=1 // loop_body
      %s253 = sadd.s32 %s248, 8
      %s254 = sadd.s32 %s16, %s253
      %p255 = scmp.lt.s32.totalorder %s254, 15
      %s256 = scalar_select %p255, %s254, 15
      %s257 = sld [smem:[#allocation4 + %s256]]
      %s258 = sand.u32 %s253, 7
      %s259 = scalar_lea.sflag [#allocation2], %s258
      %s260 = smul.u32 1, 1
      %s261 = sshll.u32 %s260, 4
      %262 = dma.done %s259, %s261
    $region49: #{tpu_custom_call.1} parent=1 // loop_footer
      %s252 = sadd.s32 1, %s248
    $region50: #{tpu_custom_call.1} parent=1 // loop_footer_branch
      %247 = sbr.rel target = $region46
    $region51: #{tpu_custom_call.1} parent=1 // loop_exit
      _
    %v263 = vld [vmem:[#allocation5] sm:$0xff]
    %v264 = vld [vmem:[#allocation5 + $0x8] sm:$0xff]
    %v265 = vmul.f32 %v263, 0.17677669
    %v266 = vmul.f32 %v264, 0.17677669
    %267 = vst [vmem:[#allocation5] sm:$0xff] %v265
    %268 = vst [vmem:[#allocation5 + $0x8] sm:$0xff] %v266
    // Predicated region
    $region52: #{tpu_custom_call.1} parent=1 // pred_check
      _
    $region53: #{tpu_custom_call.1} parent=1 // pred_check_branch
      %270 = sbr.rel (0) target = $region55
    $region54: #{tpu_custom_call.1} parent=1 // pred_region
      %272 = vsyncadd [#allocation6], 0
      %s273 = sshll.u32 [#allocation5], 4
      %s274 = int_to_ptr.vmem [resolvable:$true] %s273
      %s275 = sshll.u32 %s2, 4
      %s276 = int_to_ptr.hbm [resolvable:$true] %s275
      %281 = dma.vmem_to_hbm [thread:$0]  %s274, 256, %s276, [#allocation6], 128, 128, 8
    $region55: #{tpu_custom_call.1} parent=1 // pred_fallthru
      _
    // Predicated region
    $region56: #{tpu_custom_call.1} parent=1 // pred_check
      _
    $region57: #{tpu_custom_call.1} parent=1 // pred_check_branch
      %283 = sbr.rel (0) target = $region59
    $region58: #{tpu_custom_call.1} parent=1 // pred_region
      %285 = dma.done [#allocation6], 256
    $region59: #{tpu_custom_call.1} parent=1 // pred_fallthru
      _
    %286 = vsyncpa [#allocation6], 1
  %287 = vsyncmov [#allocation2]
  %s288 = vpop.sfrf %287
  %p289 = scmp.eq.s32.totalorder %s288, 0
  %p290 = pneg %p289
  %292 = shalt.err (%p290)
  %s293 = scalar_lea.sflag [#allocation2], 1
  %294 = vsyncmov %s293
  %s295 = vpop.sfrf %294
  %p296 = scmp.eq.s32.totalorder %s295, 0
  %p297 = pneg %p296
  %299 = shalt.err (%p297)
  %s300 = scalar_lea.sflag [#allocation2], 2
  %301 = vsyncmov %s300
  %s302 = vpop.sfrf %301
  %p303 = scmp.eq.s32.totalorder %s302, 0
  %p304 = pneg %p303
  %306 = shalt.err (%p304)
  %s307 = scalar_lea.sflag [#allocation2], 3
  %308 = vsyncmov %s307
  %s309 = vpop.sfrf %308
  %p310 = scmp.eq.s32.totalorder %s309, 0
  %p311 = pneg %p310
  %313 = shalt.err (%p311)
  %s314 = scalar_lea.sflag [#allocation2], 4
  %315 = vsyncmov %s314
  %s316 = vpop.sfrf %315
  %p317 = scmp.eq.s32.totalorder %s316, 0
  %p318 = pneg %p317
  %320 = shalt.err (%p318)
  %s321 = scalar_lea.sflag [#allocation2], 5
  %322 = vsyncmov %s321
  %s323 = vpop.sfrf %322
  %p324 = scmp.eq.s32.totalorder %s323, 0
  %p325 = pneg %p324
  %327 = shalt.err (%p325)
  %s328 = scalar_lea.sflag [#allocation2], 6
  %329 = vsyncmov %s328
  %s330 = vpop.sfrf %329
  %p331 = scmp.eq.s32.totalorder %s330, 0
  %p332 = pneg %p331
  %334 = shalt.err (%p332)
  %s335 = scalar_lea.sflag [#allocation2], 7
  %336 = vsyncmov %s335
  %s337 = vpop.sfrf %336
  %p338 = scmp.eq.s32.totalorder %s337, 0
  %p339 = pneg %p338
  %341 = shalt.err (%p339)

</llo_original>
